<compile_context>
chip_gen: v6e
topology: v6e:2x2x1
jax: 0.10.0
libtpu: 0.0.40
codegen_flags: <defaults>
</compile_context>

<pallas_src>
import numpy as np
import jax
import jax.numpy as jnp
from jax.experimental import pallas as pl
from jax.experimental.pallas import tpu as pltpu


# ----------------------------------------------------------------------------
# Grouping logic (faithful port of the module's __init__ bookkeeping; host glue)
# ----------------------------------------------------------------------------
def build_grouping(binary_mat, n_x_f, n_x_b, n_x_o):
    n_in = n_x_f + n_x_b
    full_input_condition = []
    for i in range(n_x_o):
        cond = 1
        for j in range(n_in):
            cond = cond * int(binary_mat[i, j])
        full_input_condition.append(cond)

    selected_state_idx_mat = []
    n_x_o_mat = []
    i = 0
    while i < n_x_o:
        if full_input_condition[i] == 0:
            sel = [j for j in range(n_in) if int(binary_mat[i, j]) == 1]
            selected_state_idx_mat.append(sel)
            n_x_o_mat.append(1)
        elif full_input_condition[i] == 1:
            c = 1
            while i + c < n_x_o and full_input_condition[i + c] == 1:
                c += 1
            selected_state_idx_mat.append(list(range(n_in)))
            n_x_o_mat.append(c)
            i = i + c - 1
        i += 1
    return selected_state_idx_mat, n_x_o_mat


# ----------------------------------------------------------------------------
# Parameter construction (deterministic, synthetic)
# ----------------------------------------------------------------------------
def init_subnet_params(key, sel_mat, nout_mat, n_feat, init_std):
    """Per-subnet params: (W1 (n_sel,H), b1 (H,), W2 (H,n_out), b2 (n_out,))."""
    params = []
    for sel, n_out in zip(sel_mat, nout_mat):
        key, k1, k2, k3, k4 = jax.random.split(key, 5)
        n_sel = len(sel)
        w1 = init_std * jax.random.normal(k1, (n_sel, n_feat), jnp.float32)
        b1 = 0.01 * jax.random.normal(k2, (n_feat,), jnp.float32)
        w2 = init_std * jax.random.normal(k3, (n_feat, n_out), jnp.float32)
        b2 = 0.01 * jax.random.normal(k4, (n_out,), jnp.float32)
        params.append((w1, b1, w2, b2))
    return params


def fuse_params(params, sel_mat, nout_mat, n_x_f, n_x_b, n_feat, n_x_o,
                u_mean, u_std, y_mean, y_std, sh_pad, in_pad, out_pad):
    """Build transposed, padded fused weights for the batch-on-lanes kernel.

    Returns:
      w1t     (sh_pad, in_pad) f32 : W1aug^T.  Columns 0..n_in-1 carry the
              normalize-folded first layer (diag(1/u_std) @ W1 densified over
              subnets); column n_in carries the folded bias b1 (consumed by
              the constant-1 row of x^T); remaining columns are zero.
      w2t     (out_pad, sh_pad) f32 : densified W2^T, UNscaled (exact),
              zero rows for padded outputs.
      y_scale (out_pad, 1) f32 : y_std per real output row, 0 for padding.
      y_shift (out_pad, 1) f32 : b2*y_std + y_mean per real output row, 0 pad.
    Padded hidden columns / output rows are zero, so they contribute exactly 0.
    """
    H = n_feat
    n_in = n_x_f + n_x_b
    W1 = np.zeros((n_in, sh_pad), np.float32)
    b1 = np.zeros((sh_pad,), np.float32)
    W2 = np.zeros((sh_pad, n_x_o), np.float32)
    b2 = np.zeros((n_x_o,), np.float32)
    col = 0
    for i, ((w1, bb1, w2, bb2), sel, n_out) in enumerate(zip(params, sel_mat, nout_mat)):
        W1[np.asarray(sel), i * H:(i + 1) * H] = np.asarray(w1)
        b1[i * H:(i + 1) * H] = np.asarray(bb1)
        W2[i * H:(i + 1) * H, col:col + n_out] = np.asarray(w2)
        b2[col:col + n_out] = np.asarray(bb2)
        col += n_out

    # Fold AugModel's zscore_normalize of the inputs (exact affine fold):
    #   ((x - mu) * istd) @ W1 + b1 == x @ (diag(istd) W1) + (b1 - (mu*istd) @ W1)
    mu = np.asarray(u_mean, np.float32)
    istd = (1.0 / np.asarray(u_std, np.float32)).astype(np.float32)
    b1 = b1 - (mu * istd) @ W1
    W1 = istd[:, None] * W1

    # Transposed, feature-padded W1 with the bias riding on column n_in
    # (matches the constant-1 row of the packed input slab).
    w1t = np.zeros((sh_pad, in_pad), np.float32)
    w1t[:, :n_in] = W1.T
    w1t[:, n_in] = b1

    # Transposed, output-padded W2 (UNscaled; denorm applied in f32 epilogue).
    w2t = np.zeros((out_pad, sh_pad), np.float32)
    w2t[:n_x_o, :] = W2.T

    # Fused epilogue:  y_denorm = (h @ W2 + b2) * y_std + y_mean
    #                          = (W2^T h^T) * y_std + (b2*y_std + y_mean)
    y_scale = np.zeros((out_pad, 1), np.float32)
    y_shift = np.zeros((out_pad, 1), np.float32)
    ys = np.asarray(y_std, np.float32)
    ym = np.asarray(y_mean, np.float32)
    y_scale[:n_x_o, 0] = ys
    y_shift[:n_x_o, 0] = b2 * ys + ym

    return (jnp.asarray(w1t), jnp.asarray(w2t),
            jnp.asarray(y_scale), jnp.asarray(y_shift))


# ----------------------------------------------------------------------------
# Pallas kernel (batch on lanes):
#   y^T = (W2^T @ tanh(W1aug^T @ x_aug^T)) * y_scale + y_shift
# normalize fold in W1aug, b1 on the constant-1 input row, denorm in epilogue.
# ----------------------------------------------------------------------------
def fans_mlp_kernel(xt_ref, w1t_ref, w2t_ref, yscale_ref, yshift_ref, yt_ref):
    # First layer: (SH_PAD, IN_PAD) @ (IN_PAD, TILE_B) -> (SH_PAD, TILE_B).
    # The folded b1 rides on the constant-1 input row, so no separate bias add.
    h = jnp.tanh(jnp.dot(w1t_ref[...], xt_ref[...],
                         preferred_element_type=jnp.float32))
    # Second layer: (OUT_PAD, SH_PAD) @ (SH_PAD, TILE_B) -> (OUT_PAD, TILE_B).
    y = jnp.dot(w2t_ref[...], h, preferred_element_type=jnp.float32)
    # Exact f32 denormalize + output-bias epilogue; lane-dense unmasked store.
    yt_ref[...] = y * yscale_ref[...] + yshift_ref[...]


def fans_forward_pallas(x_f, x_b, w1t, w2t, y_scale, y_shift, n_x_o, tile_b=512):
    B = x_f.shape[0]
    n_in = x_f.shape[1] + x_b.shape[1]
    sh_pad, in_pad = w1t.shape
    out_pad = w2t.shape[0]
    assert n_in + 1 <= in_pad

    # Ragged batches: pad B up to a multiple of tile_b, slice back at the end.
    # (On v7x, prefer a tile_b that keeps the tile count even so the two
    #  TensorCores split the "parallel" grid evenly.)
    n_tiles = int(pl.cdiv(B, tile_b))
    b_pad = n_tiles * tile_b

    # Packed, transposed input slab (layout plumbing only):
    #   rows 0..n_in-1 = [x_f | x_b]^T, row n_in = 1.0 (bias row), rest = 0.
    xt = jnp.concatenate(
        [x_f, x_b,
         jnp.ones((B, 1), x_f.dtype),
         jnp.zeros((B, in_pad - n_in - 1), x_f.dtype)], axis=1).T  # (in_pad, B)
    if b_pad != B:
        xt = jnp.pad(xt, ((0, 0), (0, b_pad - B)))

    flops = 2 * b_pad * (in_pad * sh_pad + sh_pad * out_pad)
    bytes_accessed = (xt.size + b_pad * out_pad
                      + w1t.size + w2t.size + y_scale.size + y_shift.size) * 4

    yt = pl.pallas_call(
        fans_mlp_kernel,
        out_shape=jax.ShapeDtypeStruct((out_pad, b_pad), jnp.float32),
        grid_spec=pltpu.PrefetchScalarGridSpec(
            num_scalar_prefetch=0,
            grid=(n_tiles,),
            in_specs=[
                # Activation tiles stream along the batch (lane) grid axis.
                pl.BlockSpec((in_pad, tile_b), lambda i: (0, i)),
                # Weights / epilogue constants: constant index_map -> VMEM-resident.
                pl.BlockSpec((sh_pad, in_pad), lambda i: (0, 0)),
                pl.BlockSpec((out_pad, sh_pad), lambda i: (0, 0)),
                pl.BlockSpec((out_pad, 1), lambda i: (0, 0)),
                pl.BlockSpec((out_pad, 1), lambda i: (0, 0)),
            ],
            out_specs=pl.BlockSpec((out_pad, tile_b), lambda i: (0, i)),
        ),
        compiler_params=pltpu.CompilerParams(
            # Parallel batch axis: megacore sharding on v7x, pipelining elsewhere.
            dimension_semantics=("parallel",),
            # Tiny working set (<1 MiB even at tile_b=4096); 32 MiB is safe on
            # all generations including v7x (64 MiB physical / 32 MiB scoped).
            vmem_limit_bytes=32 * 1024 * 1024,
        ),
        cost_estimate=pl.CostEstimate(
            flops=int(flops),
            transcendentals=int(b_pad * sh_pad),
            bytes_accessed=int(bytes_accessed),
        ),
    )(xt, w1t, w2t, y_scale, y_shift)

    # Slice padded output rows / batch columns off and restore (B, n_x_o).
    return yt[:n_x_o, :B].T


# ----------------------------------------------------------------------------
# Pure-JAX reference: explicit AugModel shell (normalize -> subnets -> denorm)
# using the UN-fused, UN-folded per-subnet parameters.
# ----------------------------------------------------------------------------
def fans_forward_ref(x_f, x_b, params, sel_mat, u_mean, u_std, y_mean, y_std):
    x = jnp.concatenate([x_f, x_b], axis=-1)
    x = (x - u_mean) / u_std                      # datascaler.zscore_normalize
    outs = []
    for (w1, b1, w2, b2), sel in zip(params, sel_mat):
        z = x[:, jnp.asarray(sel, jnp.int32)]
        h = jnp.tanh(z @ w1 + b1)
        outs.append(h @ w2 + b2)
    y = jnp.concatenate(outs, axis=-1)
    return y * y_std + y_mean                     # datascaler.zscore_denormalize


if __name__ == "__main__":
    # Small, module-consistent shapes.  B is intentionally NOT a multiple of
    # the tile to exercise the ragged-batch padding path.
    B = 1000               # batch of signals; padded to 1024 -> 2 tiles (even)
    TILE_B = 512           # sweep 512-4096 for realistic batches
    n_x_f, n_x_b, n_x_o = 3, 2, 4
    n_in = n_x_f + n_x_b
    n_feat = 32            # hidden width per subnet, num_hidden_layers=1
    init_std = 1e-4        # module default

    # Binary_mat: rows 0,1 use the full input; rows 2,3 use partial inputs.
    Binary_mat = np.array(
        [[1, 1, 1, 1, 1],
         [1, 1, 1, 1, 1],
         [1, 0, 1, 0, 1],
         [0, 1, 0, 1, 0]], dtype=np.int32)

    sel_mat, nout_mat = build_grouping(Binary_mat, n_x_f, n_x_b, n_x_o)
    S = len(sel_mat)
    SH_PAD = max(128, ((S * n_feat + 127) // 128) * 128)   # 96 -> 128 (MXU tile)
    IN_PAD = 8                                             # 5 feats + bias row + pad
    OUT_PAD = 8                                            # 4 -> 8 sublanes

    key = jax.random.PRNGKey(0)
    key, kf, kb, kp, ks = jax.random.split(key, 5)

    # Synthetic datascaler statistics (stand-in for AugModel.datascaler.*).
    ks1, ks2, ks3, ks4 = jax.random.split(ks, 4)
    u_mean = jax.random.normal(ks1, (n_in,), jnp.float32)
    u_std = 0.5 + jax.random.uniform(ks2, (n_in,), dtype=jnp.float32)
    y_mean = jax.random.normal(ks3, (n_x_o,), jnp.float32)
    y_std = 0.5 + jax.random.uniform(ks4, (n_x_o,), dtype=jnp.float32)

    # Inputs in the 'denorm' domain, as AugModel.forward(domain='denorm') expects.
    x_f = u_mean[:n_x_f] + u_std[:n_x_f] * jax.random.normal(kf, (B, n_x_f), jnp.float32)
    x_b = u_mean[n_x_f:] + u_std[n_x_f:] * jax.random.normal(kb, (B, n_x_b), jnp.float32)

    params = init_subnet_params(kp, sel_mat, nout_mat, n_feat, init_std)
    w1t, w2t, y_scale, y_shift = fuse_params(
        params, sel_mat, nout_mat, n_x_f, n_x_b, n_feat, n_x_o,
        u_mean, u_std, y_mean, y_std, SH_PAD, IN_PAD, OUT_PAD)

    y = fans_forward_pallas(x_f, x_b, w1t, w2t, y_scale, y_shift, n_x_o,
                            tile_b=TILE_B)
    y = jax.block_until_ready(y)

    y_ref = fans_forward_ref(x_f, x_b, params, sel_mat, u_mean, u_std, y_mean, y_std)
    assert y.shape == (B, n_x_o)
    # All-f32 compute with exact affine folds -> tight tolerance.
    assert jnp.allclose(y, y_ref, atol=1e-3, rtol=1e-3), "mismatch vs reference"

    print("KERNEL_OK")
</pallas_src>

<mosaic_0001>
module attributes {stable_mosaic.version = 11 : i64} {
  func.func @fans_mlp_kernel(%arg0: i32, %arg1: memref<8x512xf32, #tpu.memory_space<vmem>>, %arg2: memref<128x8xf32, #tpu.memory_space<vmem>>, %arg3: memref<8x128xf32, #tpu.memory_space<vmem>>, %arg4: memref<8x1xf32, #tpu.memory_space<vmem>>, %arg5: memref<8x1xf32, #tpu.memory_space<vmem>>, %arg6: memref<8x512xf32, #tpu.memory_space<vmem>>) attributes {dimension_semantics = [#tpu.dimension_semantics<parallel>], iteration_bounds = array<i64: 2>, scalar_prefetch = 0 : i64, scratch_operands = 0 : i64, tpu.core_type = #tpu.core_type<tc>, window_params = [{transform_indices = @transform_0, window_bounds = array<i64: 8, 512>}, {pipeline_mode = #tpu.pipeline_mode<synchronous>, transform_indices = @transform_1, window_bounds = array<i64: 128, 8>}, {pipeline_mode = #tpu.pipeline_mode<synchronous>, transform_indices = @transform_2, window_bounds = array<i64: 8, 128>}, {pipeline_mode = #tpu.pipeline_mode<synchronous>, transform_indices = @transform_3, window_bounds = array<i64: 8, 1>}, {pipeline_mode = #tpu.pipeline_mode<synchronous>, transform_indices = @transform_4, window_bounds = array<i64: 8, 1>}, {transform_indices = @transform_5, window_bounds = array<i64: 8, 512>}]} {
    %c0 = arith.constant 0 : index
    %c0_0 = arith.constant 0 : index
    %0 = vector.load %arg2[%c0, %c0_0] : memref<128x8xf32, #tpu.memory_space<vmem>>, vector<128x8xf32>
    %c0_1 = arith.constant 0 : index
    %c0_2 = arith.constant 0 : index
    %1 = vector.load %arg1[%c0_1, %c0_2] : memref<8x512xf32, #tpu.memory_space<vmem>>, vector<8x512xf32>
    %cst = arith.constant dense<0.000000e+00> : vector<128x512xf32>
    %2 = tpu.matmul %0, %1, %cst {dimension_numbers = #tpu.dot_dimension_numbers<[1], [0], [0], [1], [0, 0, 1, 1], [], []>} : vector<128x8xf32>, vector<8x512xf32>, vector<128x512xf32> -> vector<128x512xf32>
    %3 = math.tanh %2 : vector<128x512xf32>
    %c0_3 = arith.constant 0 : index
    %c0_4 = arith.constant 0 : index
    %4 = vector.load %arg3[%c0_3, %c0_4] : memref<8x128xf32, #tpu.memory_space<vmem>>, vector<8x128xf32>
    %cst_5 = arith.constant dense<0.000000e+00> : vector<8x512xf32>
    %5 = tpu.matmul %4, %3, %cst_5 {dimension_numbers = #tpu.dot_dimension_numbers<[1], [0], [0], [1], [0, 0, 1, 1], [], []>} : vector<8x128xf32>, vector<128x512xf32>, vector<8x512xf32> -> vector<8x512xf32>
    %c0_6 = arith.constant 0 : index
    %c0_7 = arith.constant 0 : index
    %6 = vector.load %arg4[%c0_6, %c0_7] : memref<8x1xf32, #tpu.memory_space<vmem>>, vector<8x1xf32>
    %7 = vector.broadcast %6 : vector<8x1xf32> to vector<8x512xf32>
    %8 = arith.mulf %5, %7 : vector<8x512xf32>
    %c0_8 = arith.constant 0 : index
    %c0_9 = arith.constant 0 : index
    %9 = vector.load %arg5[%c0_8, %c0_9] : memref<8x1xf32, #tpu.memory_space<vmem>>, vector<8x1xf32>
    %10 = vector.broadcast %9 : vector<8x1xf32> to vector<8x512xf32>
    %11 = arith.addf %8, %10 : vector<8x512xf32>
    %c0_10 = arith.constant 0 : index
    %c0_11 = arith.constant 0 : index
    %12 = vector.load %arg6[%c0_10, %c0_11] : memref<8x512xf32, #tpu.memory_space<vmem>>, vector<8x512xf32>
    tpu.vector_store %arg6[%c0_10, %c0_11], %11 {strides = array<i32>} : memref<8x512xf32, #tpu.memory_space<vmem>>, vector<8x512xf32>,
    return
  }
  func.func @transform_0(%arg0: i32) -> (i32, i32) {
    %c0_i32 = arith.constant 0 : i32
    %c0_i32_0 = arith.constant 0 : i32
    return %c0_i32, %arg0 : i32, i32
  }
  func.func @transform_1(%arg0: i32) -> (i32, i32) {
    %c0_i32 = arith.constant 0 : i32
    %c0_i32_0 = arith.constant 0 : i32
    %c0_i32_1 = arith.constant 0 : i32
    return %c0_i32, %c0_i32_0 : i32, i32
  }
  func.func @transform_2(%arg0: i32) -> (i32, i32) {
    %c0_i32 = arith.constant 0 : i32
    %c0_i32_0 = arith.constant 0 : i32
    %c0_i32_1 = arith.constant 0 : i32
    return %c0_i32, %c0_i32_0 : i32, i32
  }
  func.func @transform_3(%arg0: i32) -> (i32, i32) {
    %c0_i32 = arith.constant 0 : i32
    %c0_i32_0 = arith.constant 0 : i32
    %c0_i32_1 = arith.constant 0 : i32
    return %c0_i32, %c0_i32_0 : i32, i32
  }
  func.func @transform_4(%arg0: i32) -> (i32, i32) {
    %c0_i32 = arith.constant 0 : i32
    %c0_i32_0 = arith.constant 0 : i32
    %c0_i32_1 = arith.constant 0 : i32
    return %c0_i32, %c0_i32_0 : i32, i32
  }
  func.func @transform_5(%arg0: i32) -> (i32, i32) {
    %c0_i32 = arith.constant 0 : i32
    %c0_i32_0 = arith.constant 0 : i32
    return %c0_i32, %arg0 : i32, i32
  }
}

</mosaic_0001>

<llo_original>
// kernel: tpu_custom_call.1
$region0: #{tpu_custom_call.1}
  #allocation0 [shape = 'u32[]', space=smem, size = 0x4, offset = 0x4, fixed_abs, tag = 'smem constant byte address 0x4 - core index']
  #allocation1 [shape = 'u32[144,128]{1,0:T(1,128)}', space=vmem, size = 0x12000, scoped, tag = 'internal scratch']
  %s0 = inlined_call_operand.vmem [shape: f32[8,1024], index: 0, kind: input, shape index: {}]
  %s1 = inlined_call_operand.vmem [shape: f32[128,8], index: 1, kind: input, shape index: {}]
  %s2 = inlined_call_operand.vmem [shape: f32[8,128], index: 2, kind: input, shape index: {}]
  %s3 = inlined_call_operand.vmem [shape: f32[8,1], index: 3, kind: input, shape index: {}]
  %s4 = inlined_call_operand.vmem [shape: f32[8,1], index: 4, kind: input, shape index: {}]
  %s5 = inlined_call_operand.hbm [shape: f32[8,1024], index: 5, kind: output, shape index: {}]
  %s6 = sld [smem:[#allocation0]]
  $region53: #{tpu_custom_call.1} parent=0
    _
  %s8 = ssub.s32 1, %s6
  %s9 = scalar_select 0, %s8, %s6
  $region1: #{tpu_custom_call.1} parent=0
    #allocation2 [shape = 'u8[32768]{0}', space=vmem, size = 0x8000, scoped, tag = 'output window, operand 0']
    #allocation3 [shape = 's32[2]{0}', space=sflag, size = 0x8, scoped, tag = 'scoped memory for tpu_custom_call.1']
    %10 = vsyncpa [#allocation3], 0
    %s11 = scalar_lea.sflag [#allocation3], 1
    %12 = vsyncpa %s11, 0
    loop: start=0, step=1, limit=4
    $region2: #{tpu_custom_call.1} parent=1 // loop_pre_header
      _
    $region3: #{tpu_custom_call.1} parent=1 // loop_header
      %s14 = sphi 0, %s18
      %p15 = scmp.ge.s32.totalorder %s14, 4
      %s24 = sphi 0, %s26
      %s27 = sphi 0, %s24
      %s28 = sphi 0, %s27
      %s44 = sphi 0, %s28
      %s48 = sphi 0, %s48
      %s50 = sphi 0, %s48
      %s51 = sphi 0, %s50
      %s65 = sphi 0, %s51
      %s69 = sphi 0, %s69
      %s71 = sphi 0, %s69
      %s72 = sphi 0, %s71
      %s86 = sphi 0, %s72
      %s90 = sphi 0, %s90
      %s92 = sphi 0, %s90
      %s93 = sphi 0, %s92
      %s107 = sphi 0, %s93
      %s111 = sphi 0, %s111
      %s113 = sphi 0, %s111
      %s114 = sphi 0, %s113
      %s128 = sphi 0, %s114
      %s134 = sphi 0, %s136
      %s137 = sphi 0, %s134
      %s138 = sphi 0, %s137
      %s154 = sphi 0, %s138
    $region4: #{tpu_custom_call.1} parent=1 // loop_header_branch
      %17 = sbr.rel (%p15) target = $region8
    $region5: #{tpu_custom_call.1} parent=1 // loop_body
      %s19 = ssub.s32 %s14, 1
      %s20 = ssub.s32 %s14, 2
      %s21 = sadd.s32 %s14, 1
      %s22 = ssub.s32 %s14, %s21
      %p23 = scmp.eq.s32.totalorder %s22, 0
      %s25 = sadd.s32 %s24, 1
      %s26 = scalar_select %p23, %s24, %s25
      %p29 = pneg %p23
      %p30 = scmp.eq.s32.totalorder %s14, 1
      %p31 = por %p29, %p30
      %p32 = scmp.ne.s32.totalorder %s24, %s27
      %p33 = scmp.eq.s32.totalorder %s14, 0
      %p34 = por %p32, %p33
      %p35 = scmp.ne.s32.totalorder %s24, %s27
      %p36 = scmp.eq.s32.totalorder %s19, 1
      %p37 = por %p35, %p36
      %p38 = scmp.ne.s32.totalorder %s27, %s28
      %p39 = scmp.eq.s32.totalorder %s19, 0
      %p40 = por %p38, %p39
      %p41 = scmp.ne.s32.totalorder %s27, %s28
      %p42 = scmp.eq.s32.totalorder %s20, 1
      %p43 = por %p41, %p42
      %p45 = scmp.ne.s32.totalorder %s28, %s44
      %p46 = scmp.eq.s32.totalorder %s20, 0
      %p47 = por %p45, %p46
      %s49 = sadd.s32 %s48, 1
      %p52 = scmp.eq.s32.totalorder %s14, 1
      %p53 = scmp.ne.s32.totalorder %s48, %s50
      %p54 = scmp.eq.s32.totalorder %s14, 0
      %p55 = por %p53, %p54
      %p56 = scmp.ne.s32.totalorder %s48, %s50
      %p57 = scmp.eq.s32.totalorder %s19, 1
      %p58 = por %p56, %p57
      %p59 = scmp.ne.s32.totalorder %s50, %s51
      %p60 = scmp.eq.s32.totalorder %s19, 0
      %p61 = por %p59, %p60
      %p62 = scmp.ne.s32.totalorder %s50, %s51
      %p63 = scmp.eq.s32.totalorder %s20, 1
      %p64 = por %p62, %p63
      %p66 = scmp.ne.s32.totalorder %s51, %s65
      %p67 = scmp.eq.s32.totalorder %s20, 0
      %p68 = por %p66, %p67
      %s70 = sadd.s32 %s69, 1
      %p73 = scmp.eq.s32.totalorder %s14, 1
      %p74 = scmp.ne.s32.totalorder %s69, %s71
      %p75 = scmp.eq.s32.totalorder %s14, 0
      %p76 = por %p74, %p75
      %p77 = scmp.ne.s32.totalorder %s69, %s71
      %p78 = scmp.eq.s32.totalorder %s19, 1
      %p79 = por %p77, %p78
      %p80 = scmp.ne.s32.totalorder %s71, %s72
      %p81 = scmp.eq.s32.totalorder %s19, 0
      %p82 = por %p80, %p81
      %p83 = scmp.ne.s32.totalorder %s71, %s72
      %p84 = scmp.eq.s32.totalorder %s20, 1
      %p85 = por %p83, %p84
      %p87 = scmp.ne.s32.totalorder %s72, %s86
      %p88 = scmp.eq.s32.totalorder %s20, 0
      %p89 = por %p87, %p88
      %s91 = sadd.s32 %s90, 1
      %p94 = scmp.eq.s32.totalorder %s14, 1
      %p95 = scmp.ne.s32.totalorder %s90, %s92
      %p96 = scmp.eq.s32.totalorder %s14, 0
      %p97 = por %p95, %p96
      %p98 = scmp.ne.s32.totalorder %s90, %s92
      %p99 = scmp.eq.s32.totalorder %s19, 1
      %p100 = por %p98, %p99
      %p101 = scmp.ne.s32.totalorder %s92, %s93
      %p102 = scmp.eq.s32.totalorder %s19, 0
      %p103 = por %p101, %p102
      %p104 = scmp.ne.s32.totalorder %s92, %s93
      %p105 = scmp.eq.s32.totalorder %s20, 1
      %p106 = por %p104, %p105
      %p108 = scmp.ne.s32.totalorder %s93, %s107
      %p109 = scmp.eq.s32.totalorder %s20, 0
      %p110 = por %p108, %p109
      %s112 = sadd.s32 %s111, 1
      %p115 = scmp.eq.s32.totalorder %s14, 1
      %p116 = scmp.ne.s32.totalorder %s111, %s113
      %p117 = scmp.eq.s32.totalorder %s14, 0
      %p118 = por %p116, %p117
      %p119 = scmp.ne.s32.totalorder %s111, %s113
      %p120 = scmp.eq.s32.totalorder %s19, 1
      %p121 = por %p119, %p120
      %p122 = scmp.ne.s32.totalorder %s113, %s114
      %p123 = scmp.eq.s32.totalorder %s19, 0
      %p124 = por %p122, %p123
      %p125 = scmp.ne.s32.totalorder %s113, %s114
      %p126 = scmp.eq.s32.totalorder %s20, 1
      %p127 = por %p125, %p126
      %p129 = scmp.ne.s32.totalorder %s114, %s128
      %p130 = scmp.eq.s32.totalorder %s20, 0
      %p131 = por %p129, %p130
      %s132 = ssub.s32 %s14, %s21
      %p133 = scmp.eq.s32.totalorder %s132, 0
      %s135 = sadd.s32 %s134, 1
      %s136 = scalar_select %p133, %s134, %s135
      %p139 = pneg %p133
      %p140 = scmp.eq.s32.totalorder %s14, 1
      %p141 = por %p139, %p140
      %p142 = scmp.ne.s32.totalorder %s134, %s137
      %p143 = scmp.eq.s32.totalorder %s14, 0
      %p144 = por %p142, %p143
      %p145 = scmp.ne.s32.totalorder %s134, %s137
      %p146 = scmp.eq.s32.totalorder %s19, 1
      %p147 = por %p145, %p146
      %p148 = scmp.ne.s32.totalorder %s137, %s138
      %p149 = scmp.eq.s32.totalorder %s19, 0
      %p150 = por %p148, %p149
      %p151 = scmp.ne.s32.totalorder %s137, %s138
      %p152 = scmp.eq.s32.totalorder %s20, 1
      %p153 = por %p151, %p152
      %p155 = scmp.ne.s32.totalorder %s138, %s154
      %p156 = scmp.eq.s32.totalorder %s20, 0
      %p157 = por %p155, %p156
      %p158 = scmp.le.s32.totalorder 1, %s14
      %p159 = scmp.lt.s32.totalorder %s14, 3
      %p160 = pnand %p158, %p159
      %p161 = pneg %p160
      // Predicated region
      $region9: #{tpu_custom_call.1} parent=5 // pred_check
        _
      $region10: #{tpu_custom_call.1} parent=5 // pred_check_branch
        %163 = sbr.rel (%p160) target = $region12
      $region11: #{tpu_custom_call.1} parent=5 // pred_region
        %s164 = ssub.s32 %s14, 1
        // Predicated region
        $region13: #{tpu_custom_call.1} parent=11 // pred_check
          %p165 = pneg %p61
        $region14: #{tpu_custom_call.1} parent=11 // pred_check_branch
          %167 = sbr.rel (%p165) target = $region16
        $region15: #{tpu_custom_call.1} parent=11 // pred_region
          _
        $region16: #{tpu_custom_call.1} parent=11 // pred_fallthru
          _
        // Predicated region
        $region17: #{tpu_custom_call.1} parent=11 // pred_check
          %p168 = pneg %p82
        $region18: #{tpu_custom_call.1} parent=11 // pred_check_branch
          %170 = sbr.rel (%p168) target = $region20
        $region19: #{tpu_custom_call.1} parent=11 // pred_region
          _
        $region20: #{tpu_custom_call.1} parent=11 // pred_fallthru
          _
        // Predicated region
        $region21: #{tpu_custom_call.1} parent=11 // pred_check
          %p171 = pneg %p103
        $region22: #{tpu_custom_call.1} parent=11 // pred_check_branch
          %173 = sbr.rel (%p171) target = $region24
        $region23: #{tpu_custom_call.1} parent=11 // pred_region
          _
        $region24: #{tpu_custom_call.1} parent=11 // pred_fallthru
          _
        // Predicated region
        $region25: #{tpu_custom_call.1} parent=11 // pred_check
          %p174 = pneg %p124
        $region26: #{tpu_custom_call.1} parent=11 // pred_check_branch
          %176 = sbr.rel (%p174) target = $region28
        $region27: #{tpu_custom_call.1} parent=11 // pred_region
          _
        $region28: #{tpu_custom_call.1} parent=11 // pred_fallthru
          _
      $region12: #{tpu_custom_call.1} parent=5 // pred_fallthru
        _
      %p177 = scmp.lt.s32.totalorder %s14, 2
      // Predicated region
      $region29: #{tpu_custom_call.1} parent=5 // pred_check
        %p178 = pneg %p177
      $region30: #{tpu_custom_call.1} parent=5 // pred_check_branch
        %180 = sbr.rel (%p178) target = $region32
      $region31: #{tpu_custom_call.1} parent=5 // pred_region
        // Predicated region
        $region33: #{tpu_custom_call.1} parent=31 // pred_check
          %p181 = pneg %p34
        $region34: #{tpu_custom_call.1} parent=31 // pred_check_branch
          %183 = sbr.rel (%p181) target = $region36
        $region35: #{tpu_custom_call.1} parent=31 // pred_region
          %s184 = smul.u32 4, %s14
          %p185 = scmp.lt.s32.totalorder %s184, 7
          %s186 = scalar_select %p185, %s184, 7
          %s187 = smul.addr %s186, 8
          %s188 = scalar_lea.vmem %s0, %s187
          %s189 = smul.u32 4, %s14
        $region36: #{tpu_custom_call.1} parent=31 // pred_fallthru
          _
      $region32: #{tpu_custom_call.1} parent=5 // pred_fallthru
        _
      %p190 = scmp.le.s32.totalorder 1, %s14
      %p191 = scmp.lt.s32.totalorder %s14, 3
      %p192 = pnand %p190, %p191
      %p193 = pneg %p192
      // Predicated region
      $region37: #{tpu_custom_call.1} parent=5 // pred_check
        _
      $region38: #{tpu_custom_call.1} parent=5 // pred_check_branch
        %195 = sbr.rel (%p192) target = $region40
      $region39: #{tpu_custom_call.1} parent=5 // pred_region
        %s196 = ssub.s32 %s14, 1
        %s197 = smul.u32 4, %s19
        %p198 = scmp.lt.s32.totalorder %s197, 7
        %s199 = scalar_select %p198, %s197, 7
        %s200 = smul.addr %s199, 8
        %s201 = scalar_lea.vmem %s0, %s200
        %p202 = pneg %p40
        %p203 = pneg %p37
        %p204 = pneg %p61
        %p205 = pneg %p58
        %p206 = pneg %p82
        %p207 = pneg %p79
        %p208 = pneg %p103
        %p209 = pneg %p100
        %p210 = pneg %p124
        %p211 = pneg %p121
        %p212 = pneg %p150
        %p213 = pneg %p147
        %s214 = sand.u32 %s137, 1
        %s215 = scalar_lea.sflag [#allocation3], %s214
        %s216 = sand.u32 %s137, 1
        %s217 = smul.addr %s216, 32
        %s218 = scalar_lea.vmem [#allocation2], %s217
        %s219 = smul.u32 4, %s19
        %p220 = scmp.lt.s32.totalorder %s219, 7
        %s221 = scalar_select %p220, %s219, 7
        %s222 = smul.addr %s221, 8
        %s223 = scalar_lea.vmem %s0, %s222
        %s224 = smul.u32 4, %s19
        %s225 = smul.u32 4, %s19
        %v226 = vld [vmem:[%s1] sm:$0xff]
        %v227 = vld [vmem:[%s1 + $0x8] sm:$0xff]
        %v228 = vld [vmem:[%s1 + $0x10] sm:$0xff]
        %v229 = vld [vmem:[%s1 + $0x18] sm:$0xff]
        %v230 = vld [vmem:[%s1 + $0x20] sm:$0xff]
        %v231 = vld [vmem:[%s1 + $0x28] sm:$0xff]
        %v232 = vld [vmem:[%s1 + $0x30] sm:$0xff]
        %v233 = vld [vmem:[%s1 + $0x38] sm:$0xff]
        %v234 = vld [vmem:[%s1 + $0x40] sm:$0xff]
        %v235 = vld [vmem:[%s1 + $0x48] sm:$0xff]
        %v236 = vld [vmem:[%s1 + $0x50] sm:$0xff]
        %v237 = vld [vmem:[%s1 + $0x58] sm:$0xff]
        %v238 = vld [vmem:[%s1 + $0x60] sm:$0xff]
        %v239 = vld [vmem:[%s1 + $0x68] sm:$0xff]
        %v240 = vld [vmem:[%s1 + $0x70] sm:$0xff]
        %v241 = vld [vmem:[%s1 + $0x78] sm:$0xff]
        %v242 = vld [vmem:[%s223] sm:$0xff]
        %v243 = vld [vmem:[%s223 + $0x8] sm:$0xff]
        %v244 = vld [vmem:[%s223 + $0x10] sm:$0xff]
        %v245 = vld [vmem:[%s223 + $0x18] sm:$0xff]
        %vm246 = vcmask 64512
        %v248 = vsel %vm246, %v226, 0
        %v251 = vsel %vm246, %v227, 0
        %v254 = vsel %vm246, %v228, 0
        %v257 = vsel %vm246, %v229, 0
        %v260 = vsel %vm246, %v230, 0
        %v263 = vsel %vm246, %v231, 0
        %v266 = vsel %vm246, %v232, 0
        %v269 = vsel %vm246, %v233, 0
        %v272 = vsel %vm246, %v234, 0
        %v275 = vsel %vm246, %v235, 0
        %v278 = vsel %vm246, %v236, 0
        %v281 = vsel %vm246, %v237, 0
        %v284 = vsel %vm246, %v238, 0
        %v287 = vsel %vm246, %v239, 0
        %v290 = vsel %vm246, %v240, 0
        %v293 = vsel %vm246, %v241, 0
        %295 = vmatprep.subr.mxu0 0.0
        %296 = vmatpush1.msra.mxu0 0.0
        %297 = vmatprep.subr.mxu0 0.0
        %298 = vmatpush1.msra.mxu0 0.0
        %299 = vmatprep.subr.mxu0 0.0
        %300 = vmatpush1.msra.mxu0 0.0
        %301 = vmatprep.subr.mxu0 0.0
        %302 = vmatpush1.msra.mxu0 0.0
        %303 = vmatprep.subr.mxu0 0.0
        %304 = vmatpush1.msra.mxu0 0.0
        %305 = vmatprep.subr.mxu0 0.0
        %306 = vmatpush1.msra.mxu0 0.0
        %307 = vmatprep.subr.mxu0 0.0
        %308 = vmatpush1.msra.mxu0 0.0
        %309 = vmatprep.subr.mxu0 0.0
        %310 = vmatpush1.msra.mxu0 0.0
        %311 = vmatprep.subr.mxu0 0.0
        %312 = vmatpush1.msra.mxu0 0.0
        %313 = vmatprep.subr.mxu0 0.0
        %314 = vmatpush1.msra.mxu0 0.0
        %315 = vmatprep.subr.mxu0 0.0
        %316 = vmatpush1.msra.mxu0 0.0
        %317 = vmatprep.subr.mxu0 0.0
        %318 = vmatpush1.msra.mxu0 0.0
        %319 = vmatprep.subr.mxu0 0.0
        %320 = vmatpush1.msra.mxu0 0.0
        %321 = vmatprep.subr.mxu0 0.0
        %322 = vmatpush1.msra.mxu0 0.0
        %323 = vmatprep.subr.mxu0 0.0
        %324 = vmatpush1.msra.mxu0 0.0
        %325 = vmatprep.subr.mxu0 %v243
        %326 = vmatpush1.msra.mxu0 %v242
        %327 = vmatprep.subr.mxu0 0.0
        %328 = vmatpush2.msra.mxu0 0.0
        %329 = vmatprep.subr.mxu0 0.0
        %330 = vmatpush2.msra.mxu0 0.0
        %331 = vmatprep.subr.mxu0 0.0
        %332 = vmatpush2.msra.mxu0 0.0
        %333 = vmatprep.subr.mxu0 0.0
        %334 = vmatpush2.msra.mxu0 0.0
        %335 = vmatprep.subr.mxu0 0.0
        %336 = vmatpush2.msra.mxu0 0.0
        %337 = vmatprep.subr.mxu0 0.0
        %338 = vmatpush2.msra.mxu0 0.0
        %339 = vmatprep.subr.mxu0 0.0
        %340 = vmatpush2.msra.mxu0 0.0
        %341 = vmatprep.subr.mxu0 0.0
        %342 = vmatpush2.msra.mxu0 0.0
        %343 = vmatprep.subr.mxu0 0.0
        %344 = vmatpush2.msra.mxu0 0.0
        %345 = vmatprep.subr.mxu0 0.0
        %346 = vmatpush2.msra.mxu0 0.0
        %347 = vmatprep.subr.mxu0 0.0
        %348 = vmatpush2.msra.mxu0 0.0
        %349 = vmatprep.subr.mxu0 0.0
        %350 = vmatpush2.msra.mxu0 0.0
        %351 = vmatprep.subr.mxu0 0.0
        %352 = vmatpush2.msra.mxu0 0.0
        %353 = vmatprep.subr.mxu0 0.0
        %354 = vmatpush2.msra.mxu0 0.0
        %355 = vmatprep.subr.mxu0 0.0
        %356 = vmatpush2.msra.mxu0 0.0
        %357 = vmatprep.subr.mxu0 0.0
        %358 = vmatpush2.msra.mxu0 0.0
        %359 = vmatprep.mubr.f32.mxu0 0.0
        %360 = vmatmul.mubr.f32.gmra.mxu0 %v248
        %v361 = vpop.f32.mrf.mxu0
        %v362 = vadd.f32 0.0, %v361
        %v363 = vpop.f32.mrf.mxu0
        %v364 = vadd.f32 0.0, %v363
        %365 = vmatprep.mubr.f32.mxu0 0.0
        %366 = vmatmul.mubr.f32.gmra.mxu0 %v251
        %v367 = vpop.f32.mrf.mxu0
        %v368 = vadd.f32 0.0, %v367
        %v369 = vpop.f32.mrf.mxu0
        %v370 = vadd.f32 0.0, %v369
        %371 = vmatprep.mubr.f32.mxu0 0.0
        %372 = vmatmul.mubr.f32.gmra.mxu0 %v254
        %v373 = vpop.f32.mrf.mxu0
        %v374 = vadd.f32 0.0, %v373
        %v375 = vpop.f32.mrf.mxu0
        %v376 = vadd.f32 0.0, %v375
        %377 = vmatprep.mubr.f32.mxu0 0.0
        %378 = vmatmul.mubr.f32.gmra.mxu0 %v257
        %v379 = vpop.f32.mrf.mxu0
        %v380 = vadd.f32 0.0, %v379
        %v381 = vpop.f32.mrf.mxu0
        %v382 = vadd.f32 0.0, %v381
        %383 = vmatprep.mubr.f32.mxu0 0.0
        %384 = vmatmul.mubr.f32.gmra.mxu0 %v260
        %v385 = vpop.f32.mrf.mxu0
        %v386 = vadd.f32 0.0, %v385
        %v387 = vpop.f32.mrf.mxu0
        %v388 = vadd.f32 0.0, %v387
        %389 = vmatprep.mubr.f32.mxu0 0.0
        %390 = vmatmul.mubr.f32.gmra.mxu0 %v263
        %v391 = vpop.f32.mrf.mxu0
        %v392 = vadd.f32 0.0, %v391
        %v393 = vpop.f32.mrf.mxu0
        %v394 = vadd.f32 0.0, %v393
        %395 = vmatprep.mubr.f32.mxu0 0.0
        %396 = vmatmul.mubr.f32.gmra.mxu0 %v266
        %v397 = vpop.f32.mrf.mxu0
        %v398 = vadd.f32 0.0, %v397
        %v399 = vpop.f32.mrf.mxu0
        %v400 = vadd.f32 0.0, %v399
        %401 = vmatprep.mubr.f32.mxu0 0.0
        %402 = vmatmul.mubr.f32.gmra.mxu0 %v269
        %v403 = vpop.f32.mrf.mxu0
        %v404 = vadd.f32 0.0, %v403
        %v405 = vpop.f32.mrf.mxu0
        %v406 = vadd.f32 0.0, %v405
        %407 = vmatprep.mubr.f32.mxu0 0.0
        %408 = vmatmul.mubr.f32.gmra.mxu0 %v272
        %v409 = vpop.f32.mrf.mxu0
        %v410 = vadd.f32 0.0, %v409
        %v411 = vpop.f32.mrf.mxu0
        %v412 = vadd.f32 0.0, %v411
        %413 = vmatprep.mubr.f32.mxu0 0.0
        %414 = vmatmul.mubr.f32.gmra.mxu0 %v275
        %v415 = vpop.f32.mrf.mxu0
        %v416 = vadd.f32 0.0, %v415
        %v417 = vpop.f32.mrf.mxu0
        %v418 = vadd.f32 0.0, %v417
        %419 = vmatprep.mubr.f32.mxu0 0.0
        %420 = vmatmul.mubr.f32.gmra.mxu0 %v278
        %v421 = vpop.f32.mrf.mxu0
        %v422 = vadd.f32 0.0, %v421
        %v423 = vpop.f32.mrf.mxu0
        %v424 = vadd.f32 0.0, %v423
        %425 = vmatprep.mubr.f32.mxu0 0.0
        %426 = vmatmul.mubr.f32.gmra.mxu0 %v281
        %v427 = vpop.f32.mrf.mxu0
        %v428 = vadd.f32 0.0, %v427
        %v429 = vpop.f32.mrf.mxu0
        %v430 = vadd.f32 0.0, %v429
        %431 = vmatprep.mubr.f32.mxu0 0.0
        %432 = vmatmul.mubr.f32.gmra.mxu0 %v284
        %v433 = vpop.f32.mrf.mxu0
        %v434 = vadd.f32 0.0, %v433
        %v435 = vpop.f32.mrf.mxu0
        %v436 = vadd.f32 0.0, %v435
        %437 = vmatprep.mubr.f32.mxu0 0.0
        %438 = vmatmul.mubr.f32.gmra.mxu0 %v287
        %v439 = vpop.f32.mrf.mxu0
        %v440 = vadd.f32 0.0, %v439
        %v441 = vpop.f32.mrf.mxu0
        %v442 = vadd.f32 0.0, %v441
        %443 = vmatprep.mubr.f32.mxu0 0.0
        %444 = vmatmul.mubr.f32.gmra.mxu0 %v290
        %v445 = vpop.f32.mrf.mxu0
        %v446 = vadd.f32 0.0, %v445
        %v447 = vpop.f32.mrf.mxu0
        %v448 = vadd.f32 0.0, %v447
        %449 = vmatprep.mubr.f32.mxu0 0.0
        %450 = vmatmul.mubr.f32.gmra.mxu0 %v293
        %v451 = vpop.f32.mrf.mxu0
        %v452 = vadd.f32 0.0, %v451
        %v453 = vpop.f32.mrf.mxu0
        %v454 = vadd.f32 0.0, %v453
        %455 = vdwg.mxu0
        %456 = vmatprep.subr.mxu0 0.0
        %457 = vmatpush1.msra.mxu0 0.0
        %458 = vmatprep.subr.mxu0 0.0
        %459 = vmatpush1.msra.mxu0 0.0
        %460 = vmatprep.subr.mxu0 0.0
        %461 = vmatpush1.msra.mxu0 0.0
        %462 = vmatprep.subr.mxu0 0.0
        %463 = vmatpush1.msra.mxu0 0.0
        %464 = vmatprep.subr.mxu0 0.0
        %465 = vmatpush1.msra.mxu0 0.0
        %466 = vmatprep.subr.mxu0 0.0
        %467 = vmatpush1.msra.mxu0 0.0
        %468 = vmatprep.subr.mxu0 0.0
        %469 = vmatpush1.msra.mxu0 0.0
        %470 = vmatprep.subr.mxu0 0.0
        %471 = vmatpush1.msra.mxu0 0.0
        %472 = vmatprep.subr.mxu0 0.0
        %473 = vmatpush1.msra.mxu0 0.0
        %474 = vmatprep.subr.mxu0 0.0
        %475 = vmatpush1.msra.mxu0 0.0
        %476 = vmatprep.subr.mxu0 0.0
        %477 = vmatpush1.msra.mxu0 0.0
        %478 = vmatprep.subr.mxu0 0.0
        %479 = vmatpush1.msra.mxu0 0.0
        %480 = vmatprep.subr.mxu0 0.0
        %481 = vmatpush1.msra.mxu0 0.0
        %482 = vmatprep.subr.mxu0 0.0
        %483 = vmatpush1.msra.mxu0 0.0
        %484 = vmatprep.subr.mxu0 0.0
        %485 = vmatpush1.msra.mxu0 0.0
        %486 = vmatprep.subr.mxu0 %v245
        %487 = vmatpush1.msra.mxu0 %v244
        %488 = vmatprep.subr.mxu0 0.0
        %489 = vmatpush2.msra.mxu0 0.0
        %490 = vmatprep.subr.mxu0 0.0
        %491 = vmatpush2.msra.mxu0 0.0
        %492 = vmatprep.subr.mxu0 0.0
        %493 = vmatpush2.msra.mxu0 0.0
        %494 = vmatprep.subr.mxu0 0.0
        %495 = vmatpush2.msra.mxu0 0.0
        %496 = vmatprep.subr.mxu0 0.0
        %497 = vmatpush2.msra.mxu0 0.0
        %498 = vmatprep.subr.mxu0 0.0
        %499 = vmatpush2.msra.mxu0 0.0
        %500 = vmatprep.subr.mxu0 0.0
        %501 = vmatpush2.msra.mxu0 0.0
        %502 = vmatprep.subr.mxu0 0.0
        %503 = vmatpush2.msra.mxu0 0.0
        %504 = vmatprep.subr.mxu0 0.0
        %505 = vmatpush2.msra.mxu0 0.0
        %506 = vmatprep.subr.mxu0 0.0
        %507 = vmatpush2.msra.mxu0 0.0
        %508 = vmatprep.subr.mxu0 0.0
        %509 = vmatpush2.msra.mxu0 0.0
        %510 = vmatprep.subr.mxu0 0.0
        %511 = vmatpush2.msra.mxu0 0.0
        %512 = vmatprep.subr.mxu0 0.0
        %513 = vmatpush2.msra.mxu0 0.0
        %514 = vmatprep.subr.mxu0 0.0
        %515 = vmatpush2.msra.mxu0 0.0
        %516 = vmatprep.subr.mxu0 0.0
        %517 = vmatpush2.msra.mxu0 0.0
        %518 = vmatprep.subr.mxu0 0.0
        %519 = vmatpush2.msra.mxu0 0.0
        %520 = vmatprep.mubr.f32.mxu0 0.0
        %521 = vmatmul.mubr.f32.gmra.mxu0 %v248
        %v522 = vpop.f32.mrf.mxu0
        %v523 = vadd.f32 0.0, %v522
        %v524 = vpop.f32.mrf.mxu0
        %v525 = vadd.f32 0.0, %v524
        %526 = vmatprep.mubr.f32.mxu0 0.0
        %527 = vmatmul.mubr.f32.gmra.mxu0 %v251
        %v528 = vpop.f32.mrf.mxu0
        %v529 = vadd.f32 0.0, %v528
        %v530 = vpop.f32.mrf.mxu0
        %v531 = vadd.f32 0.0, %v530
        %532 = vmatprep.mubr.f32.mxu0 0.0
        %533 = vmatmul.mubr.f32.gmra.mxu0 %v254
        %v534 = vpop.f32.mrf.mxu0
        %v535 = vadd.f32 0.0, %v534
        %v536 = vpop.f32.mrf.mxu0
        %v537 = vadd.f32 0.0, %v536
        %538 = vmatprep.mubr.f32.mxu0 0.0
        %539 = vmatmul.mubr.f32.gmra.mxu0 %v257
        %v540 = vpop.f32.mrf.mxu0
        %v541 = vadd.f32 0.0, %v540
        %v542 = vpop.f32.mrf.mxu0
        %v543 = vadd.f32 0.0, %v542
        %544 = vmatprep.mubr.f32.mxu0 0.0
        %545 = vmatmul.mubr.f32.gmra.mxu0 %v260
        %v546 = vpop.f32.mrf.mxu0
        %v547 = vadd.f32 0.0, %v546
        %v548 = vpop.f32.mrf.mxu0
        %v549 = vadd.f32 0.0, %v548
        %550 = vmatprep.mubr.f32.mxu0 0.0
        %551 = vmatmul.mubr.f32.gmra.mxu0 %v263
        %v552 = vpop.f32.mrf.mxu0
        %v553 = vadd.f32 0.0, %v552
        %v554 = vpop.f32.mrf.mxu0
        %v555 = vadd.f32 0.0, %v554
        %556 = vmatprep.mubr.f32.mxu0 0.0
        %557 = vmatmul.mubr.f32.gmra.mxu0 %v266
        %v558 = vpop.f32.mrf.mxu0
        %v559 = vadd.f32 0.0, %v558
        %v560 = vpop.f32.mrf.mxu0
        %v561 = vadd.f32 0.0, %v560
        %562 = vmatprep.mubr.f32.mxu0 0.0
        %563 = vmatmul.mubr.f32.gmra.mxu0 %v269
        %v564 = vpop.f32.mrf.mxu0
        %v565 = vadd.f32 0.0, %v564
        %v566 = vpop.f32.mrf.mxu0
        %v567 = vadd.f32 0.0, %v566
        %568 = vmatprep.mubr.f32.mxu0 0.0
        %569 = vmatmul.mubr.f32.gmra.mxu0 %v272
        %v570 = vpop.f32.mrf.mxu0
        %v571 = vadd.f32 0.0, %v570
        %v572 = vpop.f32.mrf.mxu0
        %v573 = vadd.f32 0.0, %v572
        %574 = vmatprep.mubr.f32.mxu0 0.0
        %575 = vmatmul.mubr.f32.gmra.mxu0 %v275
        %v576 = vpop.f32.mrf.mxu0
        %v577 = vadd.f32 0.0, %v576
        %v578 = vpop.f32.mrf.mxu0
        %v579 = vadd.f32 0.0, %v578
        %580 = vmatprep.mubr.f32.mxu0 0.0
        %581 = vmatmul.mubr.f32.gmra.mxu0 %v278
        %v582 = vpop.f32.mrf.mxu0
        %v583 = vadd.f32 0.0, %v582
        %v584 = vpop.f32.mrf.mxu0
        %v585 = vadd.f32 0.0, %v584
        %586 = vmatprep.mubr.f32.mxu0 0.0
        %587 = vmatmul.mubr.f32.gmra.mxu0 %v281
        %v588 = vpop.f32.mrf.mxu0
        %v589 = vadd.f32 0.0, %v588
        %v590 = vpop.f32.mrf.mxu0
        %v591 = vadd.f32 0.0, %v590
        %592 = vmatprep.mubr.f32.mxu0 0.0
        %593 = vmatmul.mubr.f32.gmra.mxu0 %v284
        %v594 = vpop.f32.mrf.mxu0
        %v595 = vadd.f32 0.0, %v594
        %v596 = vpop.f32.mrf.mxu0
        %v597 = vadd.f32 0.0, %v596
        %598 = vmatprep.mubr.f32.mxu0 0.0
        %599 = vmatmul.mubr.f32.gmra.mxu0 %v287
        %v600 = vpop.f32.mrf.mxu0
        %v601 = vadd.f32 0.0, %v600
        %v602 = vpop.f32.mrf.mxu0
        %v603 = vadd.f32 0.0, %v602
        %604 = vmatprep.mubr.f32.mxu0 0.0
        %605 = vmatmul.mubr.f32.gmra.mxu0 %v290
        %v606 = vpop.f32.mrf.mxu0
        %v607 = vadd.f32 0.0, %v606
        %v608 = vpop.f32.mrf.mxu0
        %v609 = vadd.f32 0.0, %v608
        %610 = vmatprep.mubr.f32.mxu0 0.0
        %611 = vmatmul.mubr.f32.gmra.mxu0 %v293
        %v612 = vpop.f32.mrf.mxu0
        %v613 = vadd.f32 0.0, %v612
        %v614 = vpop.f32.mrf.mxu0
        %v615 = vadd.f32 0.0, %v614
        %616 = vdwg.mxu0
        %v617 = vtanh.pop %v362
        %v618 = vtanh.pop %v364
        %v619 = vtanh.pop %v523
        %v620 = vtanh.pop %v525
        %v621 = vtanh.pop %v368
        %v622 = vtanh.pop %v370
        %v623 = vtanh.pop %v529
        %v624 = vtanh.pop %v531
        %v625 = vtanh.pop %v374
        %v626 = vtanh.pop %v376
        %v627 = vtanh.pop %v535
        %v628 = vtanh.pop %v537
        %v629 = vtanh.pop %v380
        %v630 = vtanh.pop %v382
        %v631 = vtanh.pop %v541
        %v632 = vtanh.pop %v543
        %v633 = vtanh.pop %v386
        %v634 = vtanh.pop %v388
        %v635 = vtanh.pop %v547
        %v636 = vtanh.pop %v549
        %v637 = vtanh.pop %v392
        %v638 = vtanh.pop %v394
        %v639 = vtanh.pop %v553
        %v640 = vtanh.pop %v555
        %v641 = vtanh.pop %v398
        %v642 = vtanh.pop %v400
        %v643 = vtanh.pop %v559
        %v644 = vtanh.pop %v561
        %v645 = vtanh.pop %v404
        %v646 = vtanh.pop %v406
        %v647 = vtanh.pop %v565
        %v648 = vtanh.pop %v567
        %v649 = vtanh.pop %v410
        %v650 = vtanh.pop %v412
        %v651 = vtanh.pop %v571
        %v652 = vtanh.pop %v573
        %v653 = vtanh.pop %v416
        %v654 = vtanh.pop %v418
        %v655 = vtanh.pop %v577
        %v656 = vtanh.pop %v579
        %v657 = vtanh.pop %v422
        %v658 = vtanh.pop %v424
        %v659 = vtanh.pop %v583
        %v660 = vtanh.pop %v585
        %v661 = vtanh.pop %v428
        %v662 = vtanh.pop %v430
        %v663 = vtanh.pop %v589
        %v664 = vtanh.pop %v591
        %v665 = vtanh.pop %v434
        %v666 = vtanh.pop %v436
        %v667 = vtanh.pop %v595
        %v668 = vtanh.pop %v597
        %v669 = vtanh.pop %v440
        %v670 = vtanh.pop %v442
        %v671 = vtanh.pop %v601
        %v672 = vtanh.pop %v603
        %v673 = vtanh.pop %v446
        %v674 = vtanh.pop %v448
        %v675 = vtanh.pop %v607
        %v676 = vtanh.pop %v609
        %v677 = vtanh.pop %v452
        %v678 = vtanh.pop %v454
        %v679 = vtanh.pop %v613
        %v680 = vtanh.pop %v615
        %v681 = vld [vmem:[%s2] sm:$0xff]
        %682 = vmatprep.subr.mxu0 %v678
        %683 = vmatpush1.msra.mxu0 %v677
        %684 = vmatprep.subr.mxu0 %v674
        %685 = vmatpush1.msra.mxu0 %v673
        %686 = vmatprep.subr.mxu0 %v670
        %687 = vmatpush1.msra.mxu0 %v669
        %688 = vmatprep.subr.mxu0 %v666
        %689 = vmatpush1.msra.mxu0 %v665
        %690 = vmatprep.subr.mxu0 %v662
        %691 = vmatpush1.msra.mxu0 %v661
        %692 = vmatprep.subr.mxu0 %v658
        %693 = vmatpush1.msra.mxu0 %v657
        %694 = vmatprep.subr.mxu0 %v654
        %695 = vmatpush1.msra.mxu0 %v653
        %696 = vmatprep.subr.mxu0 %v650
        %697 = vmatpush1.msra.mxu0 %v649
        %698 = vmatprep.subr.mxu0 %v646
        %699 = vmatpush1.msra.mxu0 %v645
        %700 = vmatprep.subr.mxu0 %v642
        %701 = vmatpush1.msra.mxu0 %v641
        %702 = vmatprep.subr.mxu0 %v638
        %703 = vmatpush1.msra.mxu0 %v637
        %704 = vmatprep.subr.mxu0 %v634
        %705 = vmatpush1.msra.mxu0 %v633
        %706 = vmatprep.subr.mxu0 %v630
        %707 = vmatpush1.msra.mxu0 %v629
        %708 = vmatprep.subr.mxu0 %v626
        %709 = vmatpush1.msra.mxu0 %v625
        %710 = vmatprep.subr.mxu0 %v622
        %711 = vmatpush1.msra.mxu0 %v621
        %712 = vmatprep.subr.mxu0 %v618
        %713 = vmatpush1.msra.mxu0 %v617
        %714 = vmatprep.subr.mxu0 0.0
        %715 = vmatpush2.msra.mxu0 0.0
        %716 = vmatprep.subr.mxu0 0.0
        %717 = vmatpush2.msra.mxu0 0.0
        %718 = vmatprep.subr.mxu0 0.0
        %719 = vmatpush2.msra.mxu0 0.0
        %720 = vmatprep.subr.mxu0 0.0
        %721 = vmatpush2.msra.mxu0 0.0
        %722 = vmatprep.subr.mxu0 0.0
        %723 = vmatpush2.msra.mxu0 0.0
        %724 = vmatprep.subr.mxu0 0.0
        %725 = vmatpush2.msra.mxu0 0.0
        %726 = vmatprep.subr.mxu0 0.0
        %727 = vmatpush2.msra.mxu0 0.0
        %728 = vmatprep.subr.mxu0 0.0
        %729 = vmatpush2.msra.mxu0 0.0
        %730 = vmatprep.subr.mxu0 0.0
        %731 = vmatpush2.msra.mxu0 0.0
        %732 = vmatprep.subr.mxu0 0.0
        %733 = vmatpush2.msra.mxu0 0.0
        %734 = vmatprep.subr.mxu0 0.0
        %735 = vmatpush2.msra.mxu0 0.0
        %736 = vmatprep.subr.mxu0 0.0
        %737 = vmatpush2.msra.mxu0 0.0
        %738 = vmatprep.subr.mxu0 0.0
        %739 = vmatpush2.msra.mxu0 0.0
        %740 = vmatprep.subr.mxu0 0.0
        %741 = vmatpush2.msra.mxu0 0.0
        %742 = vmatprep.subr.mxu0 0.0
        %743 = vmatpush2.msra.mxu0 0.0
        %744 = vmatprep.subr.mxu0 0.0
        %745 = vmatpush2.msra.mxu0 0.0
        %746 = vmatprep.mubr.f32.mxu0 0.0
        %747 = vmatmul.mubr.f32.gmra.mxu0 %v681
        %v748 = vpop.f32.mrf.mxu0
        %v749 = vadd.f32 0.0, %v748
        %v750 = vpop.f32.mrf.mxu0
        %v751 = vadd.f32 0.0, %v750
        %752 = vdwg.mxu0
        %753 = vmatprep.subr.mxu0 %v680
        %754 = vmatpush1.msra.mxu0 %v679
        %755 = vmatprep.subr.mxu0 %v676
        %756 = vmatpush1.msra.mxu0 %v675
        %757 = vmatprep.subr.mxu0 %v672
        %758 = vmatpush1.msra.mxu0 %v671
        %759 = vmatprep.subr.mxu0 %v668
        %760 = vmatpush1.msra.mxu0 %v667
        %761 = vmatprep.subr.mxu0 %v664
        %762 = vmatpush1.msra.mxu0 %v663
        %763 = vmatprep.subr.mxu0 %v660
        %764 = vmatpush1.msra.mxu0 %v659
        %765 = vmatprep.subr.mxu0 %v656
        %766 = vmatpush1.msra.mxu0 %v655
        %767 = vmatprep.subr.mxu0 %v652
        %768 = vmatpush1.msra.mxu0 %v651
        %769 = vmatprep.subr.mxu0 %v648
        %770 = vmatpush1.msra.mxu0 %v647
        %771 = vmatprep.subr.mxu0 %v644
        %772 = vmatpush1.msra.mxu0 %v643
        %773 = vmatprep.subr.mxu0 %v640
        %774 = vmatpush1.msra.mxu0 %v639
        %775 = vmatprep.subr.mxu0 %v636
        %776 = vmatpush1.msra.mxu0 %v635
        %777 = vmatprep.subr.mxu0 %v632
        %778 = vmatpush1.msra.mxu0 %v631
        %779 = vmatprep.subr.mxu0 %v628
        %780 = vmatpush1.msra.mxu0 %v627
        %781 = vmatprep.subr.mxu0 %v624
        %782 = vmatpush1.msra.mxu0 %v623
        %783 = vmatprep.subr.mxu0 %v620
        %784 = vmatpush1.msra.mxu0 %v619
        %785 = vmatprep.subr.mxu0 0.0
        %786 = vmatpush2.msra.mxu0 0.0
        %787 = vmatprep.subr.mxu0 0.0
        %788 = vmatpush2.msra.mxu0 0.0
        %789 = vmatprep.subr.mxu0 0.0
        %790 = vmatpush2.msra.mxu0 0.0
        %791 = vmatprep.subr.mxu0 0.0
        %792 = vmatpush2.msra.mxu0 0.0
        %793 = vmatprep.subr.mxu0 0.0
        %794 = vmatpush2.msra.mxu0 0.0
        %795 = vmatprep.subr.mxu0 0.0
        %796 = vmatpush2.msra.mxu0 0.0
        %797 = vmatprep.subr.mxu0 0.0
        %798 = vmatpush2.msra.mxu0 0.0
        %799 = vmatprep.subr.mxu0 0.0
        %800 = vmatpush2.msra.mxu0 0.0
        %801 = vmatprep.subr.mxu0 0.0
        %802 = vmatpush2.msra.mxu0 0.0
        %803 = vmatprep.subr.mxu0 0.0
        %804 = vmatpush2.msra.mxu0 0.0
        %805 = vmatprep.subr.mxu0 0.0
        %806 = vmatpush2.msra.mxu0 0.0
        %807 = vmatprep.subr.mxu0 0.0
        %808 = vmatpush2.msra.mxu0 0.0
        %809 = vmatprep.subr.mxu0 0.0
        %810 = vmatpush2.msra.mxu0 0.0
        %811 = vmatprep.subr.mxu0 0.0
        %812 = vmatpush2.msra.mxu0 0.0
        %813 = vmatprep.subr.mxu0 0.0
        %814 = vmatpush2.msra.mxu0 0.0
        %815 = vmatprep.subr.mxu0 0.0
        %816 = vmatpush2.msra.mxu0 0.0
        %817 = vmatprep.mubr.f32.mxu0 0.0
        %818 = vmatmul.mubr.f32.gmra.mxu0 %v681
        %v819 = vpop.f32.mrf.mxu0
        %v820 = vadd.f32 0.0, %v819
        %v821 = vpop.f32.mrf.mxu0
        %v822 = vadd.f32 0.0, %v821
        %823 = vdwg.mxu0
        %v824 = vld [vmem:[%s3] sm:$0xff]
        %826 = vset.pattern.permute.xlu0 0
        %827 = vperm.xlu0 %826, %v824
        %v828 = vpop.permute.xlu0 %827
        %v830 = vmul.f32 %v749, %v828
        %v831 = vmul.f32 %v751, %v828
        %v832 = vmul.f32 %v820, %v828
        %v833 = vmul.f32 %v822, %v828
        %v834 = vld [vmem:[%s4] sm:$0xff]
        %836 = vset.pattern.permute.xlu0 0
        %837 = vperm.xlu0 %836, %v834
        %v838 = vpop.permute.xlu0 %837
        %v840 = vadd.f32 %v830, %v838
        %v841 = vadd.f32 %v831, %v838
        %v842 = vadd.f32 %v832, %v838
        %v843 = vadd.f32 %v833, %v838
        %844 = vst [vmem:[%s218] sm:$0xff] %v840
        %845 = vst [vmem:[%s218 + $0x8] sm:$0xff] %v841
        %846 = vst [vmem:[%s218 + $0x10] sm:$0xff] %v842
        %847 = vst [vmem:[%s218 + $0x18] sm:$0xff] %v843
        %s848 = sand.u32 %s137, 1
        %s849 = scalar_lea.sflag [#allocation3], %s848
        %s850 = sand.u32 %s137, 1
        %s851 = smul.addr %s850, 32
        %s852 = scalar_lea.vmem [#allocation2], %s851
        // Predicated region
        $region41: #{tpu_custom_call.1} parent=39 // pred_check
          %p853 = pneg %p147
        $region42: #{tpu_custom_call.1} parent=39 // pred_check_branch
          %855 = sbr.rel (%p853) target = $region44
        $region43: #{tpu_custom_call.1} parent=39 // pred_region
          %s856 = smul.u32 4, %s19
          %s858 = ssub.s32 512, 512
          %859 = vsyncadd %s849, %s858
          %s860 = smul.addr %s856, 128
          %s861 = scalar_lea.hbm %s5, %s860
          %s863 = sshll.u32 %s852, 4
          %s864 = int_to_ptr.vmem [resolvable:$true] %s863
          %866 = dma.vmem_to_hbm [thread:$0]  %s864, 512, %s861, %s849
        $region44: #{tpu_custom_call.1} parent=39 // pred_fallthru
          _
      $region40: #{tpu_custom_call.1} parent=5 // pred_fallthru
        _
      %p867 = scmp.le.s32.totalorder 2, %s14
      // Predicated region
      $region45: #{tpu_custom_call.1} parent=5 // pred_check
        %p868 = pneg %p867
      $region46: #{tpu_custom_call.1} parent=5 // pred_check_branch
        %870 = sbr.rel (%p868) target = $region48
      $region47: #{tpu_custom_call.1} parent=5 // pred_region
        %s871 = ssub.s32 %s14, 2
        // Predicated region
        $region49: #{tpu_custom_call.1} parent=47 // pred_check
          %p872 = pneg %p153
        $region50: #{tpu_custom_call.1} parent=47 // pred_check_branch
          %874 = sbr.rel (%p872) target = $region52
        $region51: #{tpu_custom_call.1} parent=47 // pred_region
          %s875 = sand.u32 %s138, 1
          %s876 = scalar_lea.sflag [#allocation3], %s875
          %s877 = sand.u32 %s138, 1
          %s878 = smul.addr %s877, 32
          %s879 = scalar_lea.vmem [#allocation2], %s878
          %880 = dma.done %s876, 512
        $region52: #{tpu_custom_call.1} parent=47 // pred_fallthru
          _
      $region48: #{tpu_custom_call.1} parent=5 // pred_fallthru
        _
    $region6: #{tpu_custom_call.1} parent=1 // loop_footer
      %s18 = sadd.s32 1, %s14
    $region7: #{tpu_custom_call.1} parent=1 // loop_footer_branch
      %13 = sbr.rel target = $region3
    $region8: #{tpu_custom_call.1} parent=1 // loop_exit
      _
    %881 = vsyncpa [#allocation3], 1
    %s882 = scalar_lea.sflag [#allocation3], 1
    %883 = vsyncpa %s882, 1

</llo_original>
